<compile_context>
chip_gen: v5e
topology: v5e:2x2
jax: 0.10.0
libtpu: 0.0.40
codegen_flags: <defaults>
</compile_context>

<pallas_src>
import math
import functools

import jax
import jax.numpy as jnp
from jax import lax
from jax.experimental import pallas as pl
from jax.experimental.pallas import tpu as pltpu

_NEG_BIG = -1e30  # finite "minus infinity": no NaN risk on fully-masked tiles


def _pick_block(T, candidates):
    for c in candidates:
        if c <= T and T % c == 0:
            return c
    return T  # small / irregular sequence lengths: one full-extent block


def _choose_head_group(n_cols, hd, C, itemsize, budget_bytes=16 * 2**20):
    """Heads-per-column-group for the QKV GEMM.

    g must divide n_cols (=3*nhead) and g*hd must be lane-aligned (multiple of
    128) or the full width; prefer the largest g whose double-buffered weight
    slab fits `budget_bytes` of VMEM.
    """
    total = n_cols * hd
    legal = []
    for g in range(1, n_cols + 1):
        if n_cols % g:
            continue
        w = g * hd
        if w % 128 == 0 or w == total:
            legal.append(g)
    fits = [g for g in legal if 2 * C * g * hd * itemsize <= budget_bytes]
    return max(fits) if fits else min(legal)


# ---------------------------------------------------------------------------
# Kernel 1: weight-stationary QKV projection GEMM.
#   grid = (n_groups, B, T//blk_t)   (column group OUTERMOST -> weight slab is
#   fetched once and stays resident across all (b, ti) steps).
#   Output is written head-major: (B, 3*nhead, T, hd), axis 1 = [q|k|v] heads.
# ---------------------------------------------------------------------------
def _qkv_kernel(x_ref, w_ref, b_ref, o_ref, *, g, hd):
    x = x_ref[0]                                            # (blk_t, C)
    y = jnp.dot(x, w_ref[...], preferred_element_type=jnp.float32)
    y = (y + b_ref[...].astype(jnp.float32)).astype(o_ref.dtype)
    for jj in range(g):                                     # static head split
        o_ref[0, jj] = y[:, jj * hd:(jj + 1) * hd]


# ---------------------------------------------------------------------------
# Kernel 2: flash attention + fused output projection.
#   grid = (B, T//blk_q, nhead, T//blk_k); head and kv axes are reductions.
# ---------------------------------------------------------------------------
def _flash_attn_proj_kernel(slopes_ref,                       # scalar prefetch
                            q_ref, k_ref, v_ref, wp_ref, bp_ref,  # inputs
                            o_ref,                                 # output
                            m_sc, l_sc, acc_sc, oacc_sc,           # VMEM scratch
                            *, blk_q, blk_k, causal, rpe, p_dtype):
    qi = pl.program_id(1)
    h = pl.program_id(2)
    ki = pl.program_id(3)
    nh = pl.num_programs(2)
    nk = pl.num_programs(3)

    # Output-projection accumulator: zero at the first (head, kv) step.
    @pl.when((h == 0) & (ki == 0))
    def _init_out():
        oacc_sc[...] = jnp.zeros_like(oacc_sc)

    # Online-softmax state: reset at the first kv step of every head.
    @pl.when(ki == 0)
    def _init_head():
        m_sc[...] = jnp.full_like(m_sc, _NEG_BIG)
        l_sc[...] = jnp.zeros_like(l_sc)
        acc_sc[...] = jnp.zeros_like(acc_sc)

    def _compute():
        q = q_ref[0, 0]                            # (blk_q, hd), pre-scaled
        k = k_ref[0, 0]                            # (blk_k, hd)
        v = v_ref[0, 0]                            # (blk_k, hd)

        # QK^T: contract the head dim without an explicit transpose.
        s = lax.dot_general(q, k, (((1,), (1,)), ((), ())),
                            preferred_element_type=jnp.float32)

        diff = None
        if causal or rpe:
            row = qi * blk_q + lax.broadcasted_iota(jnp.int32, (blk_q, blk_k), 0)
            col = ki * blk_k + lax.broadcasted_iota(jnp.int32, (blk_q, blk_k), 1)
            diff = row - col                       # >= 0 on/below the diagonal
        if rpe:
            # ALiBi-style RPE: -max(row-col, 0) * slope_h (slope from SMEM).
            rel = jnp.maximum(diff, 0).astype(jnp.float32)
            s = s - rel * slopes_ref[h]

        m_prev = m_sc[...]
        m_new = jnp.maximum(m_prev, jnp.max(s, axis=-1, keepdims=True))
        alpha = jnp.exp(m_prev - m_new)
        # bf16 exp when activations are bf16 (EUP throughput on v6e/v7x);
        # f32 inputs keep the f32 path (v5e has no bf16 EUP/VPU).
        p = jnp.exp((s - m_new).astype(p_dtype))
        if causal:
            # Masking p (not s) is robust to fully-masked rows (blk_q != blk_k).
            p = jnp.where(diff >= 0, p, jnp.zeros_like(p))
        l_sc[...] = alpha * l_sc[...] + jnp.sum(p, axis=-1, keepdims=True,
                                                dtype=jnp.float32)
        acc_sc[...] = alpha * acc_sc[...] + jnp.dot(
            p.astype(v.dtype), v, preferred_element_type=jnp.float32)
        m_sc[...] = m_new

    if causal:
        # Skip kv tiles entirely above the causal diagonal (K/V DMAs for these
        # steps are already suppressed by the clamped index_map).
        pl.when(ki * blk_k < (qi + 1) * blk_q)(_compute)
    else:
        _compute()

    # End of kv loop for this head: normalize and fold into the output proj.
    @pl.when(ki == nk - 1)
    def _project_head():
        l = l_sc[...]
        r = pl.reciprocal(l, approx=True)
        r = r * (2.0 - l * r)                       # one Newton step -> ~f32
        y_h = acc_sc[...] * r                       # (blk_q, hd)
        oacc_sc[...] += jnp.dot(y_h.astype(wp_ref.dtype), wp_ref[0],
                                preferred_element_type=jnp.float32)

    # Last head, last kv tile: add bias and write the output block.
    @pl.when((h == nh - 1) & (ki == nk - 1))
    def _finalize():
        o_ref[0] = (oacc_sc[...] + bp_ref[0].astype(jnp.float32)).astype(o_ref.dtype)


# ---------------------------------------------------------------------------
# Wrapper
# ---------------------------------------------------------------------------
def causal_self_attention(x, w_attn, b_attn, w_proj, b_proj, *, nhead,
                          causal=True, rpe=True):
    """x: (B, T, C). Weights are stored [in, out]: y = x @ W + b."""
    B, T, C = x.shape
    assert C % nhead == 0
    hd = C // nhead
    isz = x.dtype.itemsize

    # Decoupled per-kernel sequence tiles (review: blk_q is the VMEM knob,
    # blk_k is the step-overhead knob; blk_q capped at 256 for v7x 64 MiB VMEM).
    blk_t = _pick_block(T, (512, 256, 128))
    blk_q = _pick_block(T, (256, 128))
    blk_k = _pick_block(T, (512, 256, 128))

    # Fold 1/sqrt(hd) into Wq / bq (review: no per-step score scaling).
    scale = 1.0 / math.sqrt(hd)
    col_scale = jnp.concatenate([jnp.full((C,), scale, jnp.float32),
                                 jnp.ones((2 * C,), jnp.float32)])
    w_all = (w_attn * col_scale[None, :]).astype(x.dtype)        # (C, 3C)
    b_all = (b_attn * col_scale).astype(x.dtype).reshape(1, 3 * C)

    wp = w_proj.reshape(nhead, hd, C)
    bp = b_proj.reshape(1, 1, C)

    # Per-head ALiBi slopes: 2 ** (-8/nhead * (h+1)), scalar-prefetched to SMEM.
    slopes = jnp.exp2(-(8.0 / nhead) * jnp.arange(1, nhead + 1, dtype=jnp.float32))

    # ---- kernel 1: QKV GEMM, weight-stationary, head-major output -----------
    n_cols = 3 * nhead
    g = _choose_head_group(n_cols, hd, C, isz)
    n_groups = n_cols // g

    need1 = isz * (2 * blk_t * C + 2 * C * g * hd + 2 * g * hd
                   + 2 * g * blk_t * hd) + (1 << 20)
    vmem1 = int(min(64 << 20, max(32 << 20, 2 * need1)))

    qkv_heads = pl.pallas_call(
        functools.partial(_qkv_kernel, g=g, hd=hd),
        out_shape=jax.ShapeDtypeStruct((B, n_cols, T, hd), x.dtype),
        grid=(n_groups, B, T // blk_t),
        in_specs=[
            pl.BlockSpec((1, blk_t, C), lambda j, b, ti: (b, ti, 0)),   # x
            pl.BlockSpec((C, g * hd), lambda j, b, ti: (0, j)),         # W slab
            pl.BlockSpec((1, g * hd), lambda j, b, ti: (0, j)),         # bias
        ],
        out_specs=pl.BlockSpec((1, g, blk_t, hd), lambda j, b, ti: (b, j, ti, 0)),
        compiler_params=pltpu.CompilerParams(
            dimension_semantics=("parallel", "parallel", "parallel"),
            vmem_limit_bytes=vmem1),
    )(x, w_all, b_all)

    # ---- kernel 2: flash attention + output projection ----------------------
    p_dtype = jnp.bfloat16 if x.dtype == jnp.bfloat16 else jnp.float32

    def q_map(b, qi, h, ki, s):
        return (b, h, qi, 0)

    def kv_map_factory(comp):
        def kv_map(b, qi, h, ki, s):
            if causal:
                # Clamp to the last kv tile needed for this q tile so skipped
                # steps keep the same resident block (DMA elided).
                kv = jnp.minimum(ki, ((qi + 1) * blk_q - 1) // blk_k)
            else:
                kv = ki
            return (b, comp * nhead + h, kv, 0)
        return kv_map

    need2 = (isz * (2 * blk_q * hd + 4 * blk_k * hd + 2 * hd * C + 2 * C
                    + 2 * blk_q * C)
             + 4 * blk_q * (2 + hd + C)
             + 16 * blk_q * blk_k)
    vmem2 = int(min(64 << 20, max(32 << 20, 2 * need2)))

    kernel = functools.partial(_flash_attn_proj_kernel, blk_q=blk_q,
                               blk_k=blk_k, causal=causal, rpe=rpe,
                               p_dtype=p_dtype)
    return pl.pallas_call(
        kernel,
        out_shape=jax.ShapeDtypeStruct((B, T, C), x.dtype),
        grid_spec=pltpu.PrefetchScalarGridSpec(
            num_scalar_prefetch=1,
            grid=(B, T // blk_q, nhead, T // blk_k),
            in_specs=[
                pl.BlockSpec((1, 1, blk_q, hd), q_map),                  # Q
                pl.BlockSpec((1, 1, blk_k, hd), kv_map_factory(1)),      # K
                pl.BlockSpec((1, 1, blk_k, hd), kv_map_factory(2)),      # V
                pl.BlockSpec((1, hd, C), lambda b, qi, h, ki, s: (h, 0, 0)),
                pl.BlockSpec((1, 1, C), lambda b, qi, h, ki, s: (0, 0, 0)),
            ],
            out_specs=pl.BlockSpec((1, blk_q, C),
                                   lambda b, qi, h, ki, s: (b, qi, 0)),
            scratch_shapes=[
                pltpu.VMEM((blk_q, 1), jnp.float32),    # running max m
                pltpu.VMEM((blk_q, 1), jnp.float32),    # running sum l
                pltpu.VMEM((blk_q, hd), jnp.float32),   # per-head P@V acc
                pltpu.VMEM((blk_q, C), jnp.float32),    # output-projection acc
            ]),
        compiler_params=pltpu.CompilerParams(
            dimension_semantics=("parallel", "parallel", "arbitrary",
                                 "arbitrary"),
            vmem_limit_bytes=vmem2),
    )(slopes, qkv_heads, qkv_heads, qkv_heads, wp, bp)


def make_rpe(nhead, maxlen):
    """Reference RPE buffer, equal to the module's construction: -max(r-c,0)*slope_h."""
    r = jnp.arange(maxlen)[:, None]
    c = jnp.arange(maxlen)[None, :]
    base = -jnp.maximum(r - c, 0).astype(jnp.float32)               # (L, L)
    slopes = jnp.exp2(-(8.0 / nhead) * jnp.arange(1, nhead + 1, dtype=jnp.float32))
    return base[None, :, :] * slopes[:, None, None]                 # (nhead, L, L)


if __name__ == "__main__":
    B, T, C = 2, 8, 32
    nhead = 4
    maxlen = 8

    key = jax.random.PRNGKey(0)
    kx, k1, k2, k3, k4 = jax.random.split(key, 5)

    x = jax.random.normal(kx, (B, T, C), dtype=jnp.float32)

    lim = 1.0 / math.sqrt(C)
    w_attn = jax.random.uniform(k1, (C, 3 * C), jnp.float32, -lim, lim)
    b_attn = jax.random.uniform(k2, (3 * C,), jnp.float32, -lim, lim)
    w_proj = jax.random.uniform(k3, (C, C), jnp.float32, -lim, lim)
    b_proj = jax.random.uniform(k4, (C,), jnp.float32, -lim, lim)

    y = causal_self_attention(x, w_attn, b_attn, w_proj, b_proj,
                              nhead=nhead, causal=True, rpe=True)
    jax.block_until_ready(y)

    # Pure-JAX reference (same math as the PyTorch module, eval mode).
    rpe_buf = make_rpe(nhead, maxlen)

    def ref(x):
        qkv = x @ w_attn + b_attn
        qr, kr, vr = jnp.split(qkv, 3, axis=-1)
        hd = C // nhead
        qr = qr.reshape(B, T, nhead, hd).transpose(0, 2, 1, 3)
        kr = kr.reshape(B, T, nhead, hd).transpose(0, 2, 1, 3)
        vr = vr.reshape(B, T, nhead, hd).transpose(0, 2, 1, 3)
        att = (qr @ jnp.swapaxes(kr, -1, -2)) / math.sqrt(hd)
        att = att + rpe_buf[None, :, :T, :T]
        mask = jnp.tril(jnp.ones((T, T), bool))
        att = jnp.where(mask[None, None], att, -jnp.inf)
        att = jax.nn.softmax(att, axis=-1)
        out = (att @ vr).transpose(0, 2, 1, 3).reshape(B, T, C)
        return out @ w_proj + b_proj

    y_ref = ref(x)
    err = float(jnp.max(jnp.abs(y - y_ref)))
    assert jnp.allclose(y, y_ref, atol=1e-3, rtol=1e-3), err
    print("KERNEL_OK")
</pallas_src>

<mosaic_0001>
module attributes {stable_mosaic.version = 11 : i64} {
  func.func @_qkv_kernel(%arg0: i32, %arg1: i32, %arg2: i32, %arg3: memref<1x8x32xf32, #tpu.memory_space<vmem>>, %arg4: memref<32x96xf32, #tpu.memory_space<vmem>>, %arg5: memref<1x96xf32, #tpu.memory_space<vmem>>, %arg6: memref<1x12x8x8xf32, #tpu.memory_space<vmem>>) attributes {dimension_semantics = [#tpu.dimension_semantics<parallel>, #tpu.dimension_semantics<parallel>, #tpu.dimension_semantics<parallel>], iteration_bounds = array<i64: 1, 2, 1>, scalar_prefetch = 0 : i64, scratch_operands = 0 : i64, tpu.core_type = #tpu.core_type<tc>, window_params = [{transform_indices = @transform_0, window_bounds = array<i64: 1, 8, 32>}, {transform_indices = @transform_1, window_bounds = array<i64: 32, 96>}, {transform_indices = @transform_2, window_bounds = array<i64: 1, 96>}, {transform_indices = @transform_3, window_bounds = array<i64: 1, 12, 8, 8>}]} {
    %c0 = arith.constant 0 : index
    %c0_0 = arith.constant 0 : index
    %c0_1 = arith.constant 0 : index
    %0 = vector.load %arg3[%c0, %c0_0, %c0_1] : memref<1x8x32xf32, #tpu.memory_space<vmem>>, vector<1x8x32xf32>
    %1 = vector.shape_cast %0 : vector<1x8x32xf32> to vector<8x32xf32>
    %c0_2 = arith.constant 0 : index
    %c0_3 = arith.constant 0 : index
    %2 = vector.load %arg4[%c0_2, %c0_3] : memref<32x96xf32, #tpu.memory_space<vmem>>, vector<32x96xf32>
    %cst = arith.constant dense<0.000000e+00> : vector<8x96xf32>
    %3 = tpu.matmul %1, %2, %cst {dimension_numbers = #tpu.dot_dimension_numbers<[1], [0], [0], [1], [0, 0, 1, 1], [], []>} : vector<8x32xf32>, vector<32x96xf32>, vector<8x96xf32> -> vector<8x96xf32>
    %c0_4 = arith.constant 0 : index
    %c0_5 = arith.constant 0 : index
    %4 = vector.load %arg5[%c0_4, %c0_5] : memref<1x96xf32, #tpu.memory_space<vmem>>, vector<1x96xf32>
    %5 = vector.broadcast %4 : vector<1x96xf32> to vector<8x96xf32>
    %6 = arith.addf %3, %5 : vector<8x96xf32>
    %7 = vector.extract_strided_slice %6 {offsets = [0, 0], sizes = [8, 8], strides = [1, 1]} : vector<8x96xf32> to vector<8x8xf32>
    %c0_6 = arith.constant 0 : index
    %c0_7 = arith.constant 0 : index
    %c0_8 = arith.constant 0 : index
    %c0_9 = arith.constant 0 : index
    %8 = vector.load %arg6[%c0_6, %c0_7, %c0_8, %c0_9] : memref<1x12x8x8xf32, #tpu.memory_space<vmem>>, vector<1x1x8x8xf32>
    %9 = vector.shape_cast %8 : vector<1x1x8x8xf32> to vector<8x8xf32>
    %10 = vector.shape_cast %7 : vector<8x8xf32> to vector<1x1x8x8xf32>
    tpu.vector_store %arg6[%c0_6, %c0_7, %c0_8, %c0_9], %10 {strides = array<i32>} : memref<1x12x8x8xf32, #tpu.memory_space<vmem>>, vector<1x1x8x8xf32>,
    %11 = vector.extract_strided_slice %6 {offsets = [0, 8], sizes = [8, 8], strides = [1, 1]} : vector<8x96xf32> to vector<8x8xf32>
    %c0_10 = arith.constant 0 : index
    %c1 = arith.constant 1 : index
    %c0_11 = arith.constant 0 : index
    %c0_12 = arith.constant 0 : index
    %12 = vector.load %arg6[%c0_10, %c1, %c0_11, %c0_12] : memref<1x12x8x8xf32, #tpu.memory_space<vmem>>, vector<1x1x8x8xf32>
    %13 = vector.shape_cast %12 : vector<1x1x8x8xf32> to vector<8x8xf32>
    %14 = vector.shape_cast %11 : vector<8x8xf32> to vector<1x1x8x8xf32>
    tpu.vector_store %arg6[%c0_10, %c1, %c0_11, %c0_12], %14 {strides = array<i32>} : memref<1x12x8x8xf32, #tpu.memory_space<vmem>>, vector<1x1x8x8xf32>,
    %15 = vector.extract_strided_slice %6 {offsets = [0, 16], sizes = [8, 8], strides = [1, 1]} : vector<8x96xf32> to vector<8x8xf32>
    %c0_13 = arith.constant 0 : index
    %c2 = arith.constant 2 : index
    %c0_14 = arith.constant 0 : index
    %c0_15 = arith.constant 0 : index
    %16 = vector.load %arg6[%c0_13, %c2, %c0_14, %c0_15] : memref<1x12x8x8xf32, #tpu.memory_space<vmem>>, vector<1x1x8x8xf32>
    %17 = vector.shape_cast %16 : vector<1x1x8x8xf32> to vector<8x8xf32>
    %18 = vector.shape_cast %15 : vector<8x8xf32> to vector<1x1x8x8xf32>
    tpu.vector_store %arg6[%c0_13, %c2, %c0_14, %c0_15], %18 {strides = array<i32>} : memref<1x12x8x8xf32, #tpu.memory_space<vmem>>, vector<1x1x8x8xf32>,
    %19 = vector.extract_strided_slice %6 {offsets = [0, 24], sizes = [8, 8], strides = [1, 1]} : vector<8x96xf32> to vector<8x8xf32>
    %c0_16 = arith.constant 0 : index
    %c3 = arith.constant 3 : index
    %c0_17 = arith.constant 0 : index
    %c0_18 = arith.constant 0 : index
    %20 = vector.load %arg6[%c0_16, %c3, %c0_17, %c0_18] : memref<1x12x8x8xf32, #tpu.memory_space<vmem>>, vector<1x1x8x8xf32>
    %21 = vector.shape_cast %20 : vector<1x1x8x8xf32> to vector<8x8xf32>
    %22 = vector.shape_cast %19 : vector<8x8xf32> to vector<1x1x8x8xf32>
    tpu.vector_store %arg6[%c0_16, %c3, %c0_17, %c0_18], %22 {strides = array<i32>} : memref<1x12x8x8xf32, #tpu.memory_space<vmem>>, vector<1x1x8x8xf32>,
    %23 = vector.extract_strided_slice %6 {offsets = [0, 32], sizes = [8, 8], strides = [1, 1]} : vector<8x96xf32> to vector<8x8xf32>
    %c0_19 = arith.constant 0 : index
    %c4 = arith.constant 4 : index
    %c0_20 = arith.constant 0 : index
    %c0_21 = arith.constant 0 : index
    %24 = vector.load %arg6[%c0_19, %c4, %c0_20, %c0_21] : memref<1x12x8x8xf32, #tpu.memory_space<vmem>>, vector<1x1x8x8xf32>
    %25 = vector.shape_cast %24 : vector<1x1x8x8xf32> to vector<8x8xf32>
    %26 = vector.shape_cast %23 : vector<8x8xf32> to vector<1x1x8x8xf32>
    tpu.vector_store %arg6[%c0_19, %c4, %c0_20, %c0_21], %26 {strides = array<i32>} : memref<1x12x8x8xf32, #tpu.memory_space<vmem>>, vector<1x1x8x8xf32>,
    %27 = vector.extract_strided_slice %6 {offsets = [0, 40], sizes = [8, 8], strides = [1, 1]} : vector<8x96xf32> to vector<8x8xf32>
    %c0_22 = arith.constant 0 : index
    %c5 = arith.constant 5 : index
    %c0_23 = arith.constant 0 : index
    %c0_24 = arith.constant 0 : index
    %28 = vector.load %arg6[%c0_22, %c5, %c0_23, %c0_24] : memref<1x12x8x8xf32, #tpu.memory_space<vmem>>, vector<1x1x8x8xf32>
    %29 = vector.shape_cast %28 : vector<1x1x8x8xf32> to vector<8x8xf32>
    %30 = vector.shape_cast %27 : vector<8x8xf32> to vector<1x1x8x8xf32>
    tpu.vector_store %arg6[%c0_22, %c5, %c0_23, %c0_24], %30 {strides = array<i32>} : memref<1x12x8x8xf32, #tpu.memory_space<vmem>>, vector<1x1x8x8xf32>,
    %31 = vector.extract_strided_slice %6 {offsets = [0, 48], sizes = [8, 8], strides = [1, 1]} : vector<8x96xf32> to vector<8x8xf32>
    %c0_25 = arith.constant 0 : index
    %c6 = arith.constant 6 : index
    %c0_26 = arith.constant 0 : index
    %c0_27 = arith.constant 0 : index
    %32 = vector.load %arg6[%c0_25, %c6, %c0_26, %c0_27] : memref<1x12x8x8xf32, #tpu.memory_space<vmem>>, vector<1x1x8x8xf32>
    %33 = vector.shape_cast %32 : vector<1x1x8x8xf32> to vector<8x8xf32>
    %34 = vector.shape_cast %31 : vector<8x8xf32> to vector<1x1x8x8xf32>
    tpu.vector_store %arg6[%c0_25, %c6, %c0_26, %c0_27], %34 {strides = array<i32>} : memref<1x12x8x8xf32, #tpu.memory_space<vmem>>, vector<1x1x8x8xf32>,
    %35 = vector.extract_strided_slice %6 {offsets = [0, 56], sizes = [8, 8], strides = [1, 1]} : vector<8x96xf32> to vector<8x8xf32>
    %c0_28 = arith.constant 0 : index
    %c7 = arith.constant 7 : index
    %c0_29 = arith.constant 0 : index
    %c0_30 = arith.constant 0 : index
    %36 = vector.load %arg6[%c0_28, %c7, %c0_29, %c0_30] : memref<1x12x8x8xf32, #tpu.memory_space<vmem>>, vector<1x1x8x8xf32>
    %37 = vector.shape_cast %36 : vector<1x1x8x8xf32> to vector<8x8xf32>
    %38 = vector.shape_cast %35 : vector<8x8xf32> to vector<1x1x8x8xf32>
    tpu.vector_store %arg6[%c0_28, %c7, %c0_29, %c0_30], %38 {strides = array<i32>} : memref<1x12x8x8xf32, #tpu.memory_space<vmem>>, vector<1x1x8x8xf32>,
    %39 = vector.extract_strided_slice %6 {offsets = [0, 64], sizes = [8, 8], strides = [1, 1]} : vector<8x96xf32> to vector<8x8xf32>
    %c0_31 = arith.constant 0 : index
    %c8 = arith.constant 8 : index
    %c0_32 = arith.constant 0 : index
    %c0_33 = arith.constant 0 : index
    %40 = vector.load %arg6[%c0_31, %c8, %c0_32, %c0_33] : memref<1x12x8x8xf32, #tpu.memory_space<vmem>>, vector<1x1x8x8xf32>
    %41 = vector.shape_cast %40 : vector<1x1x8x8xf32> to vector<8x8xf32>
    %42 = vector.shape_cast %39 : vector<8x8xf32> to vector<1x1x8x8xf32>
    tpu.vector_store %arg6[%c0_31, %c8, %c0_32, %c0_33], %42 {strides = array<i32>} : memref<1x12x8x8xf32, #tpu.memory_space<vmem>>, vector<1x1x8x8xf32>,
    %43 = vector.extract_strided_slice %6 {offsets = [0, 72], sizes = [8, 8], strides = [1, 1]} : vector<8x96xf32> to vector<8x8xf32>
    %c0_34 = arith.constant 0 : index
    %c9 = arith.constant 9 : index
    %c0_35 = arith.constant 0 : index
    %c0_36 = arith.constant 0 : index
    %44 = vector.load %arg6[%c0_34, %c9, %c0_35, %c0_36] : memref<1x12x8x8xf32, #tpu.memory_space<vmem>>, vector<1x1x8x8xf32>
    %45 = vector.shape_cast %44 : vector<1x1x8x8xf32> to vector<8x8xf32>
    %46 = vector.shape_cast %43 : vector<8x8xf32> to vector<1x1x8x8xf32>
    tpu.vector_store %arg6[%c0_34, %c9, %c0_35, %c0_36], %46 {strides = array<i32>} : memref<1x12x8x8xf32, #tpu.memory_space<vmem>>, vector<1x1x8x8xf32>,
    %47 = vector.extract_strided_slice %6 {offsets = [0, 80], sizes = [8, 8], strides = [1, 1]} : vector<8x96xf32> to vector<8x8xf32>
    %c0_37 = arith.constant 0 : index
    %c10 = arith.constant 10 : index
    %c0_38 = arith.constant 0 : index
    %c0_39 = arith.constant 0 : index
    %48 = vector.load %arg6[%c0_37, %c10, %c0_38, %c0_39] : memref<1x12x8x8xf32, #tpu.memory_space<vmem>>, vector<1x1x8x8xf32>
    %49 = vector.shape_cast %48 : vector<1x1x8x8xf32> to vector<8x8xf32>
    %50 = vector.shape_cast %47 : vector<8x8xf32> to vector<1x1x8x8xf32>
    tpu.vector_store %arg6[%c0_37, %c10, %c0_38, %c0_39], %50 {strides = array<i32>} : memref<1x12x8x8xf32, #tpu.memory_space<vmem>>, vector<1x1x8x8xf32>,
    %51 = vector.extract_strided_slice %6 {offsets = [0, 88], sizes = [8, 8], strides = [1, 1]} : vector<8x96xf32> to vector<8x8xf32>
    %c0_40 = arith.constant 0 : index
    %c11 = arith.constant 11 : index
    %c0_41 = arith.constant 0 : index
    %c0_42 = arith.constant 0 : index
    %52 = vector.load %arg6[%c0_40, %c11, %c0_41, %c0_42] : memref<1x12x8x8xf32, #tpu.memory_space<vmem>>, vector<1x1x8x8xf32>
    %53 = vector.shape_cast %52 : vector<1x1x8x8xf32> to vector<8x8xf32>
    %54 = vector.shape_cast %51 : vector<8x8xf32> to vector<1x1x8x8xf32>
    tpu.vector_store %arg6[%c0_40, %c11, %c0_41, %c0_42], %54 {strides = array<i32>} : memref<1x12x8x8xf32, #tpu.memory_space<vmem>>, vector<1x1x8x8xf32>,
    return
  }
  func.func @transform_0(%arg0: i32, %arg1: i32, %arg2: i32) -> (i32, i32, i32) {
    %c0_i32 = arith.constant 0 : i32
    %c0_i32_0 = arith.constant 0 : i32
    return %arg1, %arg2, %c0_i32 : i32, i32, i32
  }
  func.func @transform_1(%arg0: i32, %arg1: i32, %arg2: i32) -> (i32, i32) {
    %c0_i32 = arith.constant 0 : i32
    %c0_i32_0 = arith.constant 0 : i32
    return %c0_i32, %arg0 : i32, i32
  }
  func.func @transform_2(%arg0: i32, %arg1: i32, %arg2: i32) -> (i32, i32) {
    %c0_i32 = arith.constant 0 : i32
    %c0_i32_0 = arith.constant 0 : i32
    return %c0_i32, %arg0 : i32, i32
  }
  func.func @transform_3(%arg0: i32, %arg1: i32, %arg2: i32) -> (i32, i32, i32, i32) {
    %c0_i32 = arith.constant 0 : i32
    %c0_i32_0 = arith.constant 0 : i32
    return %arg1, %arg0, %arg2, %c0_i32 : i32, i32, i32, i32
  }
}

</mosaic_0001>

<llo_original>
// kernel: tpu_custom_call.1
$region0: #{tpu_custom_call.1}
  #allocation0 [shape = 'u32[]', space=smem, size = 0x4, offset = 0x4, fixed_abs, tag = 'smem constant byte address 0x4 - core index']
  #allocation1 [shape = 'u32[72,128]{1,0:T(1,128)}', space=vmem, size = 0x9000, scoped, tag = 'internal scratch']
  %s0 = inlined_call_operand.hbm [shape: f32[2,8,32], index: 0, kind: input, shape index: {}]
  %s1 = inlined_call_operand.hbm [shape: f32[32,96], index: 1, kind: input, shape index: {}]
  %s2 = inlined_call_operand.vmem [shape: f32[1,96], index: 2, kind: input, shape index: {}]
  %s3 = inlined_call_operand.vmem [shape: f32[2,12,8,8], index: 3, kind: output, shape index: {}]
  %s4 = sld [smem:[#allocation0]]
  $region53: #{tpu_custom_call.1} parent=0
    _
  %s6 = ssub.s32 1, %s4
  %s7 = scalar_select 0, %s6, %s4
  $region1: #{tpu_custom_call.1} parent=0
    #allocation2 [shape = 'u8[8192]{0}', space=vmem, size = 0x2000, scoped, tag = 'input window, operand 0']
    #allocation3 [shape = 's32[2]{0}', space=sflag, size = 0x8, scoped, tag = 'scoped memory for tpu_custom_call.1']
    #allocation4 [shape = 'u8[16384]{0}', space=vmem, size = 0x4000, scoped, tag = 'input window, operand 1, single buffered']
    #allocation5 [shape = 's32[1]{0}', space=sflag, size = 0x4, scoped, tag = 'scoped memory for tpu_custom_call.1']
    %8 = vsyncpa [#allocation3], 0
    %s9 = scalar_lea.sflag [#allocation3], 1
    %10 = vsyncpa %s9, 0
    %11 = vsyncpa [#allocation5], 0
    loop: start=0, step=1, limit=4
    $region2: #{tpu_custom_call.1} parent=1 // loop_pre_header
      _
    $region3: #{tpu_custom_call.1} parent=1 // loop_header
      %s13 = sphi 0, %s17
      %p14 = scmp.ge.s32.totalorder %s13, 4
      %s20 = sphi 0, %s39
      %s21 = sphi 0, %s35
      %s22 = sphi 0, %s31
      %s23 = sphi 0, %s20
      %s24 = sphi 0, %s21
      %s25 = sphi 0, %s22
      %s26 = sphi 0, %s23
      %s27 = sphi 0, %s24
      %s28 = sphi 0, %s25
      %s44 = sphi 0, %s46
      %s47 = sphi 0, %s44
      %s48 = sphi 0, %s47
      %s64 = sphi 0, %s48
      %s70 = sphi 0, %s72
      %s73 = sphi 0, %s70
      %s74 = sphi 0, %s73
      %s90 = sphi 0, %s74
      %s96 = sphi 0, %s98
      %s99 = sphi 0, %s96
      %s100 = sphi 0, %s99
      %s116 = sphi 0, %s100
      %s126 = sphi 0, %s128
      %s129 = sphi 0, %s126
      %s130 = sphi 0, %s129
      %s146 = sphi 0, %s130
    $region4: #{tpu_custom_call.1} parent=1 // loop_header_branch
      %16 = sbr.rel (%p14) target = $region8
    $region5: #{tpu_custom_call.1} parent=1 // loop_body
      %s18 = ssub.s32 %s13, 1
      %s19 = ssub.s32 %s13, 2
      %s29 = sadd.s32 1, %s22
      %p30 = scmp.ge.s32.totalorder %s29, 1
      %s31 = scalar_select %p30, 0, %s29
      %s32 = sadd.s32 1, %s21
      %s33 = scalar_select %p30, %s32, %s21
      %p34 = scmp.ge.s32.totalorder %s33, 2
      %s35 = scalar_select %p34, 0, %s33
      %s36 = sadd.s32 1, %s20
      %s37 = scalar_select %p34, %s36, %s20
      %p38 = scmp.ge.s32.totalorder %s37, 1
      %s39 = scalar_select %p38, 0, %s37
      %s40 = ssub.s32 %s21, %s35
      %s41 = ssub.s32 %s22, %s31
      %s42 = sor.u32 %s40, %s41
      %p43 = scmp.eq.s32.totalorder %s42, 0
      %s45 = sadd.s32 %s44, 1
      %s46 = scalar_select %p43, %s44, %s45
      %p49 = pneg %p43
      %p50 = scmp.eq.s32.totalorder %s13, 1
      %p51 = por %p49, %p50
      %p52 = scmp.ne.s32.totalorder %s44, %s47
      %p53 = scmp.eq.s32.totalorder %s13, 0
      %p54 = por %p52, %p53
      %p55 = scmp.ne.s32.totalorder %s44, %s47
      %p56 = scmp.eq.s32.totalorder %s18, 1
      %p57 = por %p55, %p56
      %p58 = scmp.ne.s32.totalorder %s47, %s48
      %p59 = scmp.eq.s32.totalorder %s18, 0
      %p60 = por %p58, %p59
      %p61 = scmp.ne.s32.totalorder %s47, %s48
      %p62 = scmp.eq.s32.totalorder %s19, 1
      %p63 = por %p61, %p62
      %p65 = scmp.ne.s32.totalorder %s48, %s64
      %p66 = scmp.eq.s32.totalorder %s19, 0
      %p67 = por %p65, %p66
      %s68 = ssub.s32 %s20, %s39
      %p69 = scmp.eq.s32.totalorder %s68, 0
      %s71 = sadd.s32 %s70, 1
      %s72 = scalar_select %p69, %s70, %s71
      %p75 = pneg %p69
      %p76 = scmp.eq.s32.totalorder %s13, 1
      %p77 = por %p75, %p76
      %p78 = scmp.ne.s32.totalorder %s70, %s73
      %p79 = scmp.eq.s32.totalorder %s13, 0
      %p80 = por %p78, %p79
      %p81 = scmp.ne.s32.totalorder %s70, %s73
      %p82 = scmp.eq.s32.totalorder %s18, 1
      %p83 = por %p81, %p82
      %p84 = scmp.ne.s32.totalorder %s73, %s74
      %p85 = scmp.eq.s32.totalorder %s18, 0
      %p86 = por %p84, %p85
      %p87 = scmp.ne.s32.totalorder %s73, %s74
      %p88 = scmp.eq.s32.totalorder %s19, 1
      %p89 = por %p87, %p88
      %p91 = scmp.ne.s32.totalorder %s74, %s90
      %p92 = scmp.eq.s32.totalorder %s19, 0
      %p93 = por %p91, %p92
      %s94 = ssub.s32 %s20, %s39
      %p95 = scmp.eq.s32.totalorder %s94, 0
      %s97 = sadd.s32 %s96, 1
      %s98 = scalar_select %p95, %s96, %s97
      %p101 = pneg %p95
      %p102 = scmp.eq.s32.totalorder %s13, 1
      %p103 = por %p101, %p102
      %p104 = scmp.ne.s32.totalorder %s96, %s99
      %p105 = scmp.eq.s32.totalorder %s13, 0
      %p106 = por %p104, %p105
      %p107 = scmp.ne.s32.totalorder %s96, %s99
      %p108 = scmp.eq.s32.totalorder %s18, 1
      %p109 = por %p107, %p108
      %p110 = scmp.ne.s32.totalorder %s99, %s100
      %p111 = scmp.eq.s32.totalorder %s18, 0
      %p112 = por %p110, %p111
      %p113 = scmp.ne.s32.totalorder %s99, %s100
      %p114 = scmp.eq.s32.totalorder %s19, 1
      %p115 = por %p113, %p114
      %p117 = scmp.ne.s32.totalorder %s100, %s116
      %p118 = scmp.eq.s32.totalorder %s19, 0
      %p119 = por %p117, %p118
      %s120 = ssub.s32 %s21, %s35
      %s121 = ssub.s32 %s20, %s39
      %s122 = sor.u32 %s120, %s121
      %s123 = ssub.s32 %s22, %s31
      %s124 = sor.u32 %s122, %s123
      %p125 = scmp.eq.s32.totalorder %s124, 0
      %s127 = sadd.s32 %s126, 1
      %s128 = scalar_select %p125, %s126, %s127
      %p131 = pneg %p125
      %p132 = scmp.eq.s32.totalorder %s13, 1
      %p133 = por %p131, %p132
      %p134 = scmp.ne.s32.totalorder %s126, %s129
      %p135 = scmp.eq.s32.totalorder %s13, 0
      %p136 = por %p134, %p135
      %p137 = scmp.ne.s32.totalorder %s126, %s129
      %p138 = scmp.eq.s32.totalorder %s18, 1
      %p139 = por %p137, %p138
      %p140 = scmp.ne.s32.totalorder %s129, %s130
      %p141 = scmp.eq.s32.totalorder %s18, 0
      %p142 = por %p140, %p141
      %p143 = scmp.ne.s32.totalorder %s129, %s130
      %p144 = scmp.eq.s32.totalorder %s19, 1
      %p145 = por %p143, %p144
      %p147 = scmp.ne.s32.totalorder %s130, %s146
      %p148 = scmp.eq.s32.totalorder %s19, 0
      %p149 = por %p147, %p148
      %p150 = scmp.le.s32.totalorder 1, %s13
      %p151 = scmp.lt.s32.totalorder %s13, 3
      %p152 = pnand %p150, %p151
      %p153 = pneg %p152
      // Predicated region
      $region9: #{tpu_custom_call.1} parent=5 // pred_check
        _
      $region10: #{tpu_custom_call.1} parent=5 // pred_check_branch
        %155 = sbr.rel (%p152) target = $region12
      $region11: #{tpu_custom_call.1} parent=5 // pred_region
        %s156 = ssub.s32 %s13, 1
        // Predicated region
        $region13: #{tpu_custom_call.1} parent=11 // pred_check
          %p157 = pneg %p86
        $region14: #{tpu_custom_call.1} parent=11 // pred_check_branch
          %159 = sbr.rel (%p157) target = $region16
        $region15: #{tpu_custom_call.1} parent=11 // pred_region
          %161 = vsyncadd [#allocation5], 0
          %s162 = smul.addr %s23, 8
          %s163 = scalar_lea.hbm %s1, %s162
          %s164 = sshll.u32 %s163, 4
          %s165 = int_to_ptr.hbm [resolvable:$true] %s164
          %s166 = sshll.u32 [#allocation4], 4
          %s167 = int_to_ptr.vmem [resolvable:$true] %s166
          %172 = dma.hbm_to_vmem [thread:$0]  %s165, 512, %s167, [#allocation5], 128, 128, 8
        $region16: #{tpu_custom_call.1} parent=11 // pred_fallthru
          _
        // Predicated region
        $region17: #{tpu_custom_call.1} parent=11 // pred_check
          %p173 = pneg %p112
        $region18: #{tpu_custom_call.1} parent=11 // pred_check_branch
          %175 = sbr.rel (%p173) target = $region20
        $region19: #{tpu_custom_call.1} parent=11 // pred_region
          %p176 = scmp.lt.s32.totalorder %s23, 0
          %s177 = scalar_select %p176, %s23, 0
          %s178 = scalar_lea.vmem %s2, %s177
        $region20: #{tpu_custom_call.1} parent=11 // pred_fallthru
          _
      $region12: #{tpu_custom_call.1} parent=5 // pred_fallthru
        _
      %p179 = scmp.lt.s32.totalorder %s13, 2
      // Predicated region
      $region21: #{tpu_custom_call.1} parent=5 // pred_check
        %p180 = pneg %p179
      $region22: #{tpu_custom_call.1} parent=5 // pred_check_branch
        %182 = sbr.rel (%p180) target = $region24
      $region23: #{tpu_custom_call.1} parent=5 // pred_region
        // Predicated region
        $region25: #{tpu_custom_call.1} parent=23 // pred_check
          %p183 = pneg %p54
        $region26: #{tpu_custom_call.1} parent=23 // pred_check_branch
          %185 = sbr.rel (%p183) target = $region28
        $region27: #{tpu_custom_call.1} parent=23 // pred_region
          %s186 = sand.u32 %s44, 1
          %s187 = scalar_lea.sflag [#allocation3], %s186
          %s188 = sand.u32 %s44, 1
          %s189 = smul.addr %s188, 8
          %s190 = scalar_lea.vmem [#allocation2], %s189
          %192 = vsyncadd %s187, 0
          %s193 = sadd.s32 %s22, %s21
          %s194 = smul.addr %s193, 8
          %s195 = scalar_lea.hbm %s0, %s194
          %s197 = sshll.u32 %s195, 4
          %s198 = int_to_ptr.hbm [resolvable:$true] %s197
          %s199 = sshll.u32 %s190, 4
          %s200 = int_to_ptr.vmem [resolvable:$true] %s199
          %202 = dma.hbm_to_vmem [thread:$0]  %s198, 128, %s200, %s187
        $region28: #{tpu_custom_call.1} parent=23 // pred_fallthru
          _
      $region24: #{tpu_custom_call.1} parent=5 // pred_fallthru
        _
      %p203 = scmp.le.s32.totalorder 1, %s13
      %p204 = scmp.lt.s32.totalorder %s13, 3
      %p205 = pnand %p203, %p204
      %p206 = pneg %p205
      // Predicated region
      $region29: #{tpu_custom_call.1} parent=5 // pred_check
        _
      $region30: #{tpu_custom_call.1} parent=5 // pred_check_branch
        %208 = sbr.rel (%p205) target = $region32
      $region31: #{tpu_custom_call.1} parent=5 // pred_region
        %s209 = ssub.s32 %s13, 1
        %s210 = sand.u32 %s47, 1
        %s211 = scalar_lea.sflag [#allocation3], %s210
        %s212 = sand.u32 %s47, 1
        %s213 = smul.addr %s212, 8
        %s214 = scalar_lea.vmem [#allocation2], %s213
        // Predicated region
        $region33: #{tpu_custom_call.1} parent=31 // pred_check
          %p215 = pneg %p60
        $region34: #{tpu_custom_call.1} parent=31 // pred_check_branch
          %217 = sbr.rel (%p215) target = $region36
        $region35: #{tpu_custom_call.1} parent=31 // pred_region
          %219 = dma.done %s211, 128
        $region36: #{tpu_custom_call.1} parent=31 // pred_fallthru
          _
        // Predicated region
        $region37: #{tpu_custom_call.1} parent=31 // pred_check
          %p220 = pneg %p86
        $region38: #{tpu_custom_call.1} parent=31 // pred_check_branch
          %222 = sbr.rel (%p220) target = $region40
        $region39: #{tpu_custom_call.1} parent=31 // pred_region
          %224 = dma.done [#allocation5], 512
        $region40: #{tpu_custom_call.1} parent=31 // pred_fallthru
          _
        %s225 = sand.u32 %s47, 1
        %s226 = scalar_lea.sflag [#allocation3], %s225
        %s227 = sand.u32 %s47, 1
        %s228 = smul.addr %s227, 8
        %s229 = scalar_lea.vmem [#allocation2], %s228
        %p230 = pneg %p60
        %p231 = pneg %p57
        %p232 = pneg %p86
        %p233 = pneg %p83
        %p234 = scmp.lt.s32.totalorder %s23, 0
        %s235 = scalar_select %p234, %s23, 0
        %s236 = scalar_lea.vmem %s2, %s235
        %p237 = pneg %p112
        %p238 = pneg %p109
        %p239 = pneg %p142
        %p240 = pneg %p139
        %s241 = smul.u32 12, %s23
        %p242 = scmp.lt.s32.totalorder %s24, 1
        %s243 = scalar_select %p242, %s24, 1
        %p244 = scmp.lt.s32.totalorder %s241, 11
        %s245 = scalar_select %p244, %s241, 11
        %p246 = scmp.lt.s32.totalorder %s25, 0
        %s247 = scalar_select %p246, %s25, 0
        %s248 = sadd.s32 %s247, %s245
        %s249 = smul.addr %s243, 12
        %s250 = sadd.s32 %s248, %s249
        %s251 = smul.addr %s250, 8
        %s252 = scalar_lea.vmem %s3, %s251
        %p253 = scmp.lt.s32.totalorder %s23, 0
        %s254 = scalar_select %p253, %s23, 0
        %s255 = scalar_lea.vmem %s2, %s254
        %s256 = smul.u32 12, %s23
        %p257 = scmp.lt.s32.totalorder %s24, 1
        %s258 = scalar_select %p257, %s24, 1
        %p259 = scmp.lt.s32.totalorder %s256, 11
        %s260 = scalar_select %p259, %s256, 11
        %p261 = scmp.lt.s32.totalorder %s25, 0
        %s262 = scalar_select %p261, %s25, 0
        %s263 = sadd.s32 %s262, %s260
        %s264 = smul.addr %s258, 12
        %s265 = sadd.s32 %s263, %s264
        %s266 = smul.addr %s265, 8
        %s267 = scalar_lea.vmem %s3, %s266
        %s268 = smul.u32 12, %s23
        %v269 = vld [vmem:[%s214] sm:$0xff]
        %v270 = vld [vmem:[#allocation4] sm:$0xff]
        %v271 = vld [vmem:[#allocation4 + $0x8] sm:$0xff]
        %v272 = vld [vmem:[#allocation4 + $0x10] sm:$0xff]
        %v273 = vld [vmem:[#allocation4 + $0x18] sm:$0xff]
        %v274 = vld [vmem:[%s255] sm:$0x1]
        %v276 = vperm.slane %v274, 0
        %vm278 = vcmask 261120
        %v280 = vsel %vm278, %v269, 0
        %282 = vmatpush.msra.mxu0 0.0
        %283 = vmatpush.msra.mxu0 0.0
        %284 = vmatpush.msra.mxu0 0.0
        %285 = vmatpush.msra.mxu0 0.0
        %286 = vmatpush.msra.mxu0 0.0
        %287 = vmatpush.msra.mxu0 0.0
        %288 = vmatpush.msra.mxu0 0.0
        %289 = vmatpush.msra.mxu0 0.0
        %290 = vmatpush.msra.mxu0 0.0
        %291 = vmatpush.msra.mxu0 0.0
        %292 = vmatpush.msra.mxu0 0.0
        %293 = vmatpush.msra.mxu0 0.0
        %294 = vmatpush.msra.mxu0 %v273
        %295 = vmatpush.msra.mxu0 %v272
        %296 = vmatpush.msra.mxu0 %v271
        %297 = vmatpush.msra.mxu0 %v270
        %298 = vmatmul.f32.gmra.mxu0 %v280
        %v299 = vpop.f32.mrf.mxu0
        %v300 = vadd.f32 %v276, %v299
        %301 = vdwg.mxu0
        %vm302 = vcmask 64512
        %303 = vst.msk [vmem:[%s267] sm:$0xff] %vm302, %v300
        %305 = vrot.lane.b32.xlu0 %v300, 120
        %v306 = vpop.permute.xlu0 %305
        %s308 = scalar_lea.vmem %s267, 8
        %309 = vst.msk [vmem:[%s308] sm:$0xff] %vm302, %v306
        %310 = vrot.lane.b32.xlu0 %v300, 112
        %v311 = vpop.permute.xlu0 %310
        %s313 = scalar_lea.vmem %s267, 16
        %314 = vst.msk [vmem:[%s313] sm:$0xff] %vm302, %v311
        %315 = vrot.lane.b32.xlu0 %v300, 104
        %v316 = vpop.permute.xlu0 %315
        %s318 = scalar_lea.vmem %s267, 24
        %319 = vst.msk [vmem:[%s318] sm:$0xff] %vm302, %v316
        %320 = vrot.lane.b32.xlu0 %v300, 96
        %v321 = vpop.permute.xlu0 %320
        %s323 = scalar_lea.vmem %s267, 32
        %324 = vst.msk [vmem:[%s323] sm:$0xff] %vm302, %v321
        %325 = vrot.lane.b32.xlu0 %v300, 88
        %v326 = vpop.permute.xlu0 %325
        %s328 = scalar_lea.vmem %s267, 40
        %329 = vst.msk [vmem:[%s328] sm:$0xff] %vm302, %v326
        %330 = vrot.lane.b32.xlu0 %v300, 80
        %v331 = vpop.permute.xlu0 %330
        %s333 = scalar_lea.vmem %s267, 48
        %334 = vst.msk [vmem:[%s333] sm:$0xff] %vm302, %v331
        %335 = vrot.lane.b32.xlu0 %v300, 72
        %v336 = vpop.permute.xlu0 %335
        %s338 = scalar_lea.vmem %s267, 56
        %339 = vst.msk [vmem:[%s338] sm:$0xff] %vm302, %v336
        %340 = vrot.lane.b32.xlu0 %v300, 64
        %v341 = vpop.permute.xlu0 %340
        %s343 = scalar_lea.vmem %s267, 64
        %344 = vst.msk [vmem:[%s343] sm:$0xff] %vm302, %v341
        %345 = vrot.lane.b32.xlu0 %v300, 56
        %v346 = vpop.permute.xlu0 %345
        %s348 = scalar_lea.vmem %s267, 72
        %349 = vst.msk [vmem:[%s348] sm:$0xff] %vm302, %v346
        %350 = vrot.lane.b32.xlu0 %v300, 48
        %v351 = vpop.permute.xlu0 %350
        %s353 = scalar_lea.vmem %s267, 80
        %354 = vst.msk [vmem:[%s353] sm:$0xff] %vm302, %v351
        %355 = vrot.lane.b32.xlu0 %v300, 40
        %v356 = vpop.permute.xlu0 %355
        %s358 = scalar_lea.vmem %s267, 88
        %359 = vst.msk [vmem:[%s358] sm:$0xff] %vm302, %v356
        %s360 = smul.u32 12, %s23
        %p361 = scmp.lt.s32.totalorder %s24, 1
        %s362 = scalar_select %p361, %s24, 1
        %p363 = scmp.lt.s32.totalorder %s360, 11
        %s364 = scalar_select %p363, %s360, 11
        %p365 = scmp.lt.s32.totalorder %s25, 0
        %s366 = scalar_select %p365, %s25, 0
        %s367 = sadd.s32 %s366, %s364
        %s368 = smul.addr %s362, 12
        %s369 = sadd.s32 %s367, %s368
        %s370 = smul.addr %s369, 8
        %s371 = scalar_lea.vmem %s3, %s370
        // Predicated region
        $region41: #{tpu_custom_call.1} parent=31 // pred_check
          %p372 = pneg %p139
        $region42: #{tpu_custom_call.1} parent=31 // pred_check_branch
          %374 = sbr.rel (%p372) target = $region44
        $region43: #{tpu_custom_call.1} parent=31 // pred_region
          %s375 = smul.u32 12, %s23
        $region44: #{tpu_custom_call.1} parent=31 // pred_fallthru
          _
      $region32: #{tpu_custom_call.1} parent=5 // pred_fallthru
        _
      %p376 = scmp.le.s32.totalorder 2, %s13
      // Predicated region
      $region45: #{tpu_custom_call.1} parent=5 // pred_check
        %p377 = pneg %p376
      $region46: #{tpu_custom_call.1} parent=5 // pred_check_branch
        %379 = sbr.rel (%p377) target = $region48
      $region47: #{tpu_custom_call.1} parent=5 // pred_region
        %s380 = ssub.s32 %s13, 2
        // Predicated region
        $region49: #{tpu_custom_call.1} parent=47 // pred_check
          %p381 = pneg %p145
        $region50: #{tpu_custom_call.1} parent=47 // pred_check_branch
          %383 = sbr.rel (%p381) target = $region52
        $region51: #{tpu_custom_call.1} parent=47 // pred_region
          %s384 = smul.u32 12, %s26
          %p385 = scmp.lt.s32.totalorder %s27, 1
          %s386 = scalar_select %p385, %s27, 1
          %p387 = scmp.lt.s32.totalorder %s384, 11
          %s388 = scalar_select %p387, %s384, 11
          %p389 = scmp.lt.s32.totalorder %s28, 0
          %s390 = scalar_select %p389, %s28, 0
          %s391 = sadd.s32 %s390, %s388
          %s392 = smul.addr %s386, 12
          %s393 = sadd.s32 %s391, %s392
          %s394 = smul.addr %s393, 8
          %s395 = scalar_lea.vmem %s3, %s394
        $region52: #{tpu_custom_call.1} parent=47 // pred_fallthru
          _
      $region48: #{tpu_custom_call.1} parent=5 // pred_fallthru
        _
    $region6: #{tpu_custom_call.1} parent=1 // loop_footer
      %s17 = sadd.s32 1, %s13
    $region7: #{tpu_custom_call.1} parent=1 // loop_footer_branch
      %12 = sbr.rel target = $region3
    $region8: #{tpu_custom_call.1} parent=1 // loop_exit
      _
    %396 = vsyncpa [#allocation3], 1
    %s397 = scalar_lea.sflag [#allocation3], 1
    %398 = vsyncpa %s397, 1
    %399 = vsyncpa [#allocation5], 1

</llo_original>
